<compile_context>
chip_gen: v6e
topology: v6e:2x2x1
jax: 0.10.0
libtpu: 0.0.40
codegen_flags: <defaults>
</compile_context>

<pallas_src>
import jax
import jax.numpy as jnp
from jax.experimental import pallas as pl
from jax.experimental.pallas import tpu as pltpu

_UNROLL_RES_LIMIT = 4                            # static unroll up to 4 residual blocks
_RESIDENT_WRES_LIMIT_BYTES = 12 * 1024 * 1024    # stream wres past ~12 MiB (v7x VMEM)


# ---------------------------------------------------------------------------
# Kernels
# ---------------------------------------------------------------------------
def fc1_relu_kernel(x_ref, w1_ref, o_ref):
    # numRes == 0 path:  o = relu(x @ W1)   (bf16 operands, f32 MXU accumulate)
    y = jnp.dot(x_ref[...], w1_ref[...], preferred_element_type=jnp.float32)
    o_ref[...] = jnp.maximum(y, 0.0).astype(o_ref.dtype)


def _res_block(y, wa, wb):
    # residual_block: x + relu(relu(x @ Wa) @ Wb), bf16 operands / f32 acc.
    h = jnp.maximum(
        jnp.dot(y.astype(jnp.bfloat16), wa, preferred_element_type=jnp.float32),
        0.0)
    t = jnp.maximum(
        jnp.dot(h.astype(jnp.bfloat16), wb, preferred_element_type=jnp.float32),
        0.0)
    return y + t


def dimred_fused_kernel(x_ref, w1_ref, wres_ref, o_ref):
    # Resident path: the whole wres stack lives in VMEM for the entire call;
    # the running activation never round-trips through HBM between blocks.
    y = jnp.maximum(
        jnp.dot(x_ref[...], w1_ref[...], preferred_element_type=jnp.float32),
        0.0)
    num_res = wres_ref.shape[0] // 2
    if num_res <= _UNROLL_RES_LIMIT:
        for r in range(num_res):                       # static unroll
            y = _res_block(y, wres_ref[2 * r], wres_ref[2 * r + 1])
    else:
        # Deep stacks: fori_loop bounds live ranges / code size; weights are
        # still VMEM-resident, indexed dynamically along the leading axis.
        def body(r, y):
            return _res_block(y, wres_ref[2 * r], wres_ref[2 * r + 1])

        y = jax.lax.fori_loop(0, num_res, body, y, unroll=2)
    o_ref[...] = y.astype(o_ref.dtype)


def dimred_stream_kernel(x_ref, w1_ref, wres_ref, o_ref, y_ref):
    # Streaming path for wres stacks too large to keep resident: inner
    # "arbitrary" grid axis k = 0 (fc1) .. num_res (last residual block);
    # wres_ref holds the (Wa, Wb) pair of the current block only, and the
    # running activation persists in the y_ref VMEM scratch accumulator.
    k = pl.program_id(1)

    @pl.when(k == 0)
    def _():
        y_ref[...] = jnp.maximum(
            jnp.dot(x_ref[...], w1_ref[...],
                    preferred_element_type=jnp.float32),
            0.0)

    @pl.when(k > 0)
    def _():
        y_ref[...] = _res_block(y_ref[...], wres_ref[0], wres_ref[1])

    @pl.when(k == pl.num_programs(1) - 1)
    def _():
        o_ref[...] = y_ref[...].astype(o_ref.dtype)


# ---------------------------------------------------------------------------
# Row tiling
# ---------------------------------------------------------------------------
def _row_tile_cap():
    # v5e: single vector-store slot / no bf16 VPU -> diminishing returns past
    # ~1024 rows; v6e/v7x take 2048.  Detection failure just falls back to 2048.
    try:
        kind = jax.devices()[0].device_kind.lower()
        return 1024 if "v5" in kind else 2048
    except Exception:  # pragma: no cover
        return 2048


def _choose_row_tile(n_rows):
    cap = _row_tile_cap()

    def r16(v):
        # Multiple of 16 rows: bf16 packs 16 rows per sublane group (and 16 is
        # a multiple of the 8-row f32 sublane tile).
        return max(16, ((v + 15) // 16) * 16)

    if n_rows <= 16:
        return r16(n_rows)
    steps = pl.cdiv(n_rows, cap)
    if n_rows >= 32:
        steps = max(steps, 2)       # >=2 'parallel' steps so both v7x TCs get work
    if steps <= 8 and steps % 2 == 1:
        steps += 1                  # keep small grids balanced across 2 cores
    return r16(pl.cdiv(n_rows, steps))


# ---------------------------------------------------------------------------
# Wrapper
# ---------------------------------------------------------------------------
def dim_reduction_forward(x, params, *, out_dtype=None, force_stream=False):
    """DimReduction forward.  params: {'w1': [C,D] bf16, 'wres': [2*numRes,D,D] bf16}."""
    w1 = params["w1"]
    wres = params["wres"]
    n, c = x.shape
    d = w1.shape[1]
    num_res = wres.shape[0] // 2
    if out_dtype is None:
        out_dtype = x.dtype
    # bf16 input stream: activations are rounded to bf16 for the MXU anyway;
    # feed bf16 directly from upstream to actually halve the HBM read.
    if x.dtype != jnp.bfloat16:
        x = x.astype(jnp.bfloat16)

    tm = _choose_row_tile(n)
    grid_rows = pl.cdiv(n, tm)
    out_shape = jax.ShapeDtypeStruct((n, d), out_dtype)

    def weight_spec(shape, index_map, single_buffer):
        # Constant index_map -> no need to double-buffer resident weights.
        if single_buffer:
            return pl.BlockSpec(shape, index_map, pipeline_mode=pl.Buffered(1))
        return pl.BlockSpec(shape, index_map)

    def call_fc1(single_buffer):
        return pl.pallas_call(
            fc1_relu_kernel,
            out_shape=out_shape,
            grid_spec=pltpu.PrefetchScalarGridSpec(
                num_scalar_prefetch=0,
                grid=(grid_rows,),
                in_specs=[
                    pl.BlockSpec((tm, c), lambda i: (i, 0)),
                    weight_spec((c, d), lambda i: (0, 0), single_buffer),
                ],
                out_specs=pl.BlockSpec((tm, d), lambda i: (i, 0)),
            ),
            compiler_params=pltpu.CompilerParams(
                dimension_semantics=("parallel",)),
        )(x, w1)

    def call_resident(single_buffer):
        return pl.pallas_call(
            dimred_fused_kernel,
            out_shape=out_shape,
            grid_spec=pltpu.PrefetchScalarGridSpec(
                num_scalar_prefetch=0,
                grid=(grid_rows,),
                in_specs=[
                    pl.BlockSpec((tm, c), lambda i: (i, 0)),
                    weight_spec((c, d), lambda i: (0, 0), single_buffer),
                    weight_spec((2 * num_res, d, d), lambda i: (0, 0, 0),
                                single_buffer),
                ],
                out_specs=pl.BlockSpec((tm, d), lambda i: (i, 0)),
            ),
            compiler_params=pltpu.CompilerParams(
                dimension_semantics=("parallel",)),
        )(x, w1, wres)

    def call_stream(single_buffer):
        return pl.pallas_call(
            dimred_stream_kernel,
            out_shape=out_shape,
            grid_spec=pltpu.PrefetchScalarGridSpec(
                num_scalar_prefetch=0,
                grid=(grid_rows, num_res + 1),
                in_specs=[
                    pl.BlockSpec((tm, c), lambda i, k: (i, 0)),
                    weight_spec((c, d), lambda i, k: (0, 0), single_buffer),
                    # One (Wa, Wb) pair per inner step, double-buffered so the
                    # next pair's DMA overlaps the current block's matmuls.
                    pl.BlockSpec((2, d, d),
                                 lambda i, k: (jnp.maximum(k - 1, 0), 0, 0)),
                ],
                out_specs=pl.BlockSpec((tm, d), lambda i, k: (i, 0)),
                scratch_shapes=[pltpu.VMEM((tm, d), jnp.float32)],
            ),
            compiler_params=pltpu.CompilerParams(
                dimension_semantics=("parallel", "arbitrary")),
        )(x, w1, wres)

    if num_res == 0:
        build = call_fc1
    else:
        wres_bytes = wres.size * wres.dtype.itemsize
        stream = force_stream or wres_bytes > _RESIDENT_WRES_LIMIT_BYTES
        build = call_stream if stream else call_resident

    try:
        return build(True)          # single-buffered resident weights
    except Exception:               # pl.Buffered(1) unsupported -> default double buffering
        return build(False)


# ---------------------------------------------------------------------------
# Deterministic parameter init (nn.Linear kaiming-uniform fan_in scale,
# bias=False as in the PyTorch spec).  Weights stored bf16 for the MXU.
# ---------------------------------------------------------------------------
def init_params(key, n_channels, m_dim, num_layer_res, dtype=jnp.bfloat16):
    def linear_weight(k, fan_in, fan_out):
        bound = 1.0 / jnp.sqrt(fan_in)
        w = jax.random.uniform(
            k, (fan_in, fan_out), jnp.float32, minval=-bound, maxval=bound
        )
        # PyTorch stores [out, in]; we store the transpose [in, out].
        return w.astype(dtype)

    keys = jax.random.split(key, 1 + max(1, 2 * num_layer_res))
    w1 = linear_weight(keys[0], n_channels, m_dim)
    res_ws = [
        linear_weight(keys[1 + i], m_dim, m_dim)
        for i in range(2 * num_layer_res)
    ]
    wres = (
        jnp.stack(res_ws, axis=0)
        if num_layer_res > 0
        else jnp.zeros((0, m_dim, m_dim), dtype)
    )
    return {"w1": w1, "wres": wres}


# ---------------------------------------------------------------------------
# Pure-JAX reference (mirrors the kernel's bf16-operand / f32-accumulate math)
# ---------------------------------------------------------------------------
def reference_forward(x, params):
    f32 = jnp.float32

    def bf16_round(a):
        return a.astype(jnp.bfloat16).astype(f32)

    y = jnp.maximum(
        jnp.dot(bf16_round(x), params["w1"].astype(f32),
                preferred_element_type=f32),
        0.0,
    )
    wres = params["wres"]
    for r in range(wres.shape[0] // 2):
        wa = wres[2 * r].astype(f32)
        wb = wres[2 * r + 1].astype(f32)
        h = jnp.maximum(
            jnp.dot(bf16_round(y), wa, preferred_element_type=f32), 0.0
        )
        t = jnp.maximum(
            jnp.dot(bf16_round(h), wb, preferred_element_type=f32), 0.0
        )
        y = y + t
    return y


if __name__ == "__main__":
    key = jax.random.PRNGKey(0)

    # Small shapes consistent with DimReduction.forward:
    #   x: [num_instances, n_channels] = [16, 64], m_dim = 128, numLayer_Res = 2
    N, C, D, NUM_RES = 16, 64, 128, 2
    kx, kp, kx2, kp6 = jax.random.split(key, 4)
    x = jax.random.normal(kx, (N, C), jnp.float32)
    params = init_params(kp, C, D, NUM_RES)

    out = jax.block_until_ready(dim_reduction_forward(x, params))
    ref = reference_forward(x, params)
    assert out.shape == (N, D), out.shape
    assert jnp.allclose(out, ref, atol=2e-3, rtol=2e-3), float(
        jnp.max(jnp.abs(out - ref))
    )

    # numRes == 0 path (fc1 + ReLU only).
    params0 = init_params(kp, C, D, 0)
    out0 = jax.block_until_ready(dim_reduction_forward(x, params0))
    ref0 = reference_forward(x, params0)
    assert jnp.allclose(out0, ref0, atol=2e-3, rtol=2e-3)

    # Larger N: 2 balanced 'parallel' grid steps (both v7x TensorCores busy).
    xb = jax.random.normal(kx2, (1024, C), jnp.float32)
    outb = jax.block_until_ready(dim_reduction_forward(xb, params))
    refb = reference_forward(xb, params)
    assert jnp.allclose(outb, refb, atol=2e-3, rtol=2e-3)

    # Deep residual stack exercises the fori_loop (non-unrolled) path.
    params6 = init_params(kp6, C, D, 6)
    out6 = jax.block_until_ready(dim_reduction_forward(x, params6))
    ref6 = reference_forward(x, params6)
    assert jnp.allclose(out6, ref6, atol=5e-3, rtol=5e-3)

    # Streaming-wres fallback, forced at small shapes for coverage.
    outs = jax.block_until_ready(
        dim_reduction_forward(x, params, force_stream=True))
    assert jnp.allclose(outs, ref, atol=2e-3, rtol=2e-3)

    # bf16 output option (halves the dominant HBM write stream).
    outbf = jax.block_until_ready(
        dim_reduction_forward(x, params, out_dtype=jnp.bfloat16))
    assert outbf.dtype == jnp.bfloat16
    assert jnp.allclose(outbf.astype(jnp.float32), ref, atol=5e-2, rtol=5e-2)

    print("KERNEL_OK")
</pallas_src>

<mosaic_0001>
module attributes {stable_mosaic.version = 11 : i64} {
  func.func @dimred_fused_kernel(%arg0: i32, %arg1: memref<16x64xbf16, #tpu.memory_space<vmem>>, %arg2: memref<64x128xbf16, #tpu.memory_space<vmem>>, %arg3: memref<4x128x128xbf16, #tpu.memory_space<vmem>>, %arg4: memref<16x128xf32, #tpu.memory_space<vmem>>) attributes {dimension_semantics = [#tpu.dimension_semantics<parallel>], iteration_bounds = array<i64: 1>, scalar_prefetch = 0 : i64, scratch_operands = 0 : i64, tpu.core_type = #tpu.core_type<tc>, window_params = [{transform_indices = @transform_0, window_bounds = array<i64: 16, 64>}, {pipeline_mode = #tpu.pipeline_mode<synchronous>, transform_indices = @transform_1, window_bounds = array<i64: 64, 128>}, {pipeline_mode = #tpu.pipeline_mode<synchronous>, transform_indices = @transform_2, window_bounds = array<i64: 4, 128, 128>}, {transform_indices = @transform_3, window_bounds = array<i64: 16, 128>}]} {
    %c0 = arith.constant 0 : index
    %c0_0 = arith.constant 0 : index
    %0 = vector.load %arg1[%c0, %c0_0] : memref<16x64xbf16, #tpu.memory_space<vmem>>, vector<16x64xbf16>
    %c0_1 = arith.constant 0 : index
    %c0_2 = arith.constant 0 : index
    %1 = vector.load %arg2[%c0_1, %c0_2] : memref<64x128xbf16, #tpu.memory_space<vmem>>, vector<64x128xbf16>
    %cst = arith.constant dense<0.000000e+00> : vector<16x128xf32>
    %2 = tpu.matmul %0, %1, %cst {dimension_numbers = #tpu.dot_dimension_numbers<[1], [0], [0], [1], [0, 0, 1, 1], [], []>} : vector<16x64xbf16>, vector<64x128xbf16>, vector<16x128xf32> -> vector<16x128xf32>
    %cst_3 = arith.constant 0.000000e+00 : f32
    %3 = vector.broadcast %cst_3 : f32 to vector<16x128xf32>
    %4 = arith.maximumf %2, %3 : vector<16x128xf32>
    %c0_4 = arith.constant 0 : index
    %c0_5 = arith.constant 0 : index
    %c0_6 = arith.constant 0 : index
    %5 = vector.load %arg3[%c0_4, %c0_5, %c0_6] : memref<4x128x128xbf16, #tpu.memory_space<vmem>>, vector<1x128x128xbf16>
    %6 = vector.shape_cast %5 : vector<1x128x128xbf16> to vector<128x128xbf16>
    %c1 = arith.constant 1 : index
    %c0_7 = arith.constant 0 : index
    %c0_8 = arith.constant 0 : index
    %7 = vector.load %arg3[%c1, %c0_7, %c0_8] : memref<4x128x128xbf16, #tpu.memory_space<vmem>>, vector<1x128x128xbf16>
    %8 = vector.shape_cast %7 : vector<1x128x128xbf16> to vector<128x128xbf16>
    %9 = arith.truncf %4 : vector<16x128xf32> to vector<16x128xbf16>
    %cst_9 = arith.constant dense<0.000000e+00> : vector<16x128xf32>
    %10 = tpu.matmul %9, %6, %cst_9 {dimension_numbers = #tpu.dot_dimension_numbers<[1], [0], [0], [1], [0, 0, 1, 1], [], []>} : vector<16x128xbf16>, vector<128x128xbf16>, vector<16x128xf32> -> vector<16x128xf32>
    %cst_10 = arith.constant 0.000000e+00 : f32
    %11 = vector.broadcast %cst_10 : f32 to vector<16x128xf32>
    %12 = arith.maximumf %10, %11 : vector<16x128xf32>
    %13 = arith.truncf %12 : vector<16x128xf32> to vector<16x128xbf16>
    %cst_11 = arith.constant dense<0.000000e+00> : vector<16x128xf32>
    %14 = tpu.matmul %13, %8, %cst_11 {dimension_numbers = #tpu.dot_dimension_numbers<[1], [0], [0], [1], [0, 0, 1, 1], [], []>} : vector<16x128xbf16>, vector<128x128xbf16>, vector<16x128xf32> -> vector<16x128xf32>
    %cst_12 = arith.constant 0.000000e+00 : f32
    %15 = vector.broadcast %cst_12 : f32 to vector<16x128xf32>
    %16 = arith.maximumf %14, %15 : vector<16x128xf32>
    %17 = arith.addf %4, %16 : vector<16x128xf32>
    %c2 = arith.constant 2 : index
    %c0_13 = arith.constant 0 : index
    %c0_14 = arith.constant 0 : index
    %18 = vector.load %arg3[%c2, %c0_13, %c0_14] : memref<4x128x128xbf16, #tpu.memory_space<vmem>>, vector<1x128x128xbf16>
    %19 = vector.shape_cast %18 : vector<1x128x128xbf16> to vector<128x128xbf16>
    %c3 = arith.constant 3 : index
    %c0_15 = arith.constant 0 : index
    %c0_16 = arith.constant 0 : index
    %20 = vector.load %arg3[%c3, %c0_15, %c0_16] : memref<4x128x128xbf16, #tpu.memory_space<vmem>>, vector<1x128x128xbf16>
    %21 = vector.shape_cast %20 : vector<1x128x128xbf16> to vector<128x128xbf16>
    %22 = arith.truncf %17 : vector<16x128xf32> to vector<16x128xbf16>
    %cst_17 = arith.constant dense<0.000000e+00> : vector<16x128xf32>
    %23 = tpu.matmul %22, %19, %cst_17 {dimension_numbers = #tpu.dot_dimension_numbers<[1], [0], [0], [1], [0, 0, 1, 1], [], []>} : vector<16x128xbf16>, vector<128x128xbf16>, vector<16x128xf32> -> vector<16x128xf32>
    %cst_18 = arith.constant 0.000000e+00 : f32
    %24 = vector.broadcast %cst_18 : f32 to vector<16x128xf32>
    %25 = arith.maximumf %23, %24 : vector<16x128xf32>
    %26 = arith.truncf %25 : vector<16x128xf32> to vector<16x128xbf16>
    %cst_19 = arith.constant dense<0.000000e+00> : vector<16x128xf32>
    %27 = tpu.matmul %26, %21, %cst_19 {dimension_numbers = #tpu.dot_dimension_numbers<[1], [0], [0], [1], [0, 0, 1, 1], [], []>} : vector<16x128xbf16>, vector<128x128xbf16>, vector<16x128xf32> -> vector<16x128xf32>
    %cst_20 = arith.constant 0.000000e+00 : f32
    %28 = vector.broadcast %cst_20 : f32 to vector<16x128xf32>
    %29 = arith.maximumf %27, %28 : vector<16x128xf32>
    %30 = arith.addf %17, %29 : vector<16x128xf32>
    %c0_21 = arith.constant 0 : index
    %c0_22 = arith.constant 0 : index
    %31 = vector.load %arg4[%c0_21, %c0_22] : memref<16x128xf32, #tpu.memory_space<vmem>>, vector<16x128xf32>
    tpu.vector_store %arg4[%c0_21, %c0_22], %30 {strides = array<i32>} : memref<16x128xf32, #tpu.memory_space<vmem>>, vector<16x128xf32>,
    return
  }
  func.func @transform_0(%arg0: i32) -> (i32, i32) {
    %c0_i32 = arith.constant 0 : i32
    %c0_i32_0 = arith.constant 0 : i32
    return %arg0, %c0_i32 : i32, i32
  }
  func.func @transform_1(%arg0: i32) -> (i32, i32) {
    %c0_i32 = arith.constant 0 : i32
    %c0_i32_0 = arith.constant 0 : i32
    %c0_i32_1 = arith.constant 0 : i32
    return %c0_i32, %c0_i32_0 : i32, i32
  }
  func.func @transform_2(%arg0: i32) -> (i32, i32, i32) {
    %c0_i32 = arith.constant 0 : i32
    %c0_i32_0 = arith.constant 0 : i32
    %c0_i32_1 = arith.constant 0 : i32
    %c0_i32_2 = arith.constant 0 : i32
    return %c0_i32, %c0_i32_0, %c0_i32_1 : i32, i32, i32
  }
  func.func @transform_3(%arg0: i32) -> (i32, i32) {
    %c0_i32 = arith.constant 0 : i32
    %c0_i32_0 = arith.constant 0 : i32
    return %arg0, %c0_i32 : i32, i32
  }
}

module attributes {stable_mosaic.version = 11 : i64} {
  func.func @dimred_fused_kernel(%arg0: i32, %arg1: memref<16x64xbf16, #tpu.memory_space<vmem>>, %arg2: memref<64x128xbf16, #tpu.memory_space<vmem>>, %arg3: memref<4x128x128xbf16, #tpu.memory_space<vmem>>, %arg4: memref<16x128xf32, #tpu.memory_space<vmem>>) attributes {dimension_semantics = [#tpu.dimension_semantics<parallel>], iteration_bounds = array<i64: 1>, scalar_prefetch = 0 : i64, scratch_operands = 0 : i64, tpu.core_type = #tpu.core_type<tc>, window_params = [{transform_indices = @transform_0, window_bounds = array<i64: 16, 64>}, {pipeline_mode = #tpu.pipeline_mode<synchronous>, transform_indices = @transform_1, window_bounds = array<i64: 64, 128>}, {pipeline_mode = #tpu.pipeline_mode<synchronous>, transform_indices = @transform_2, window_bounds = array<i64: 4, 128, 128>}, {transform_indices = @transform_3, window_bounds = array<i64: 16, 128>}]} {
    %c0 = arith.constant 0 : index
    %c0_0 = arith.constant 0 : index
    %0 = vector.load %arg1[%c0, %c0_0] : memref<16x64xbf16, #tpu.memory_space<vmem>>, vector<16x64xbf16>
    %c0_1 = arith.constant 0 : index
    %c0_2 = arith.constant 0 : index
    %1 = vector.load %arg2[%c0_1, %c0_2] : memref<64x128xbf16, #tpu.memory_space<vmem>>, vector<64x128xbf16>
    %cst = arith.constant dense<0.000000e+00> : vector<16x128xf32>
    %2 = tpu.matmul %0, %1, %cst {dimension_numbers = #tpu.dot_dimension_numbers<[1], [0], [0], [1], [0, 0, 1, 1], [], []>} : vector<16x64xbf16>, vector<64x128xbf16>, vector<16x128xf32> -> vector<16x128xf32>
    %cst_3 = arith.constant 0.000000e+00 : f32
    %3 = vector.broadcast %cst_3 : f32 to vector<16x128xf32>
    %4 = arith.maximumf %2, %3 : vector<16x128xf32>
    %c0_4 = arith.constant 0 : index
    %c0_5 = arith.constant 0 : index
    %c0_6 = arith.constant 0 : index
    %5 = vector.load %arg3[%c0_4, %c0_5, %c0_6] : memref<4x128x128xbf16, #tpu.memory_space<vmem>>, vector<1x128x128xbf16>
    %6 = vector.shape_cast %5 : vector<1x128x128xbf16> to vector<128x128xbf16>
    %c1 = arith.constant 1 : index
    %c0_7 = arith.constant 0 : index
    %c0_8 = arith.constant 0 : index
    %7 = vector.load %arg3[%c1, %c0_7, %c0_8] : memref<4x128x128xbf16, #tpu.memory_space<vmem>>, vector<1x128x128xbf16>
    %8 = vector.shape_cast %7 : vector<1x128x128xbf16> to vector<128x128xbf16>
    %9 = arith.truncf %4 : vector<16x128xf32> to vector<16x128xbf16>
    %cst_9 = arith.constant dense<0.000000e+00> : vector<16x128xf32>
    %10 = tpu.matmul %9, %6, %cst_9 {dimension_numbers = #tpu.dot_dimension_numbers<[1], [0], [0], [1], [0, 0, 1, 1], [], []>} : vector<16x128xbf16>, vector<128x128xbf16>, vector<16x128xf32> -> vector<16x128xf32>
    %cst_10 = arith.constant 0.000000e+00 : f32
    %11 = vector.broadcast %cst_10 : f32 to vector<16x128xf32>
    %12 = arith.maximumf %10, %11 : vector<16x128xf32>
    %13 = arith.truncf %12 : vector<16x128xf32> to vector<16x128xbf16>
    %cst_11 = arith.constant dense<0.000000e+00> : vector<16x128xf32>
    %14 = tpu.matmul %13, %8, %cst_11 {dimension_numbers = #tpu.dot_dimension_numbers<[1], [0], [0], [1], [0, 0, 1, 1], [], []>} : vector<16x128xbf16>, vector<128x128xbf16>, vector<16x128xf32> -> vector<16x128xf32>
    %cst_12 = arith.constant 0.000000e+00 : f32
    %15 = vector.broadcast %cst_12 : f32 to vector<16x128xf32>
    %16 = arith.maximumf %14, %15 : vector<16x128xf32>
    %17 = arith.addf %4, %16 : vector<16x128xf32>
    %c2 = arith.constant 2 : index
    %c0_13 = arith.constant 0 : index
    %c0_14 = arith.constant 0 : index
    %18 = vector.load %arg3[%c2, %c0_13, %c0_14] : memref<4x128x128xbf16, #tpu.memory_space<vmem>>, vector<1x128x128xbf16>
    %19 = vector.shape_cast %18 : vector<1x128x128xbf16> to vector<128x128xbf16>
    %c3 = arith.constant 3 : index
    %c0_15 = arith.constant 0 : index
    %c0_16 = arith.constant 0 : index
    %20 = vector.load %arg3[%c3, %c0_15, %c0_16] : memref<4x128x128xbf16, #tpu.memory_space<vmem>>, vector<1x128x128xbf16>
    %21 = vector.shape_cast %20 : vector<1x128x128xbf16> to vector<128x128xbf16>
    %22 = arith.truncf %17 : vector<16x128xf32> to vector<16x128xbf16>
    %cst_17 = arith.constant dense<0.000000e+00> : vector<16x128xf32>
    %23 = tpu.matmul %22, %19, %cst_17 {dimension_numbers = #tpu.dot_dimension_numbers<[1], [0], [0], [1], [0, 0, 1, 1], [], []>} : vector<16x128xbf16>, vector<128x128xbf16>, vector<16x128xf32> -> vector<16x128xf32>
    %cst_18 = arith.constant 0.000000e+00 : f32
    %24 = vector.broadcast %cst_18 : f32 to vector<16x128xf32>
    %25 = arith.maximumf %23, %24 : vector<16x128xf32>
    %26 = arith.truncf %25 : vector<16x128xf32> to vector<16x128xbf16>
    %cst_19 = arith.constant dense<0.000000e+00> : vector<16x128xf32>
    %27 = tpu.matmul %26, %21, %cst_19 {dimension_numbers = #tpu.dot_dimension_numbers<[1], [0], [0], [1], [0, 0, 1, 1], [], []>} : vector<16x128xbf16>, vector<128x128xbf16>, vector<16x128xf32> -> vector<16x128xf32>
    %cst_20 = arith.constant 0.000000e+00 : f32
    %28 = vector.broadcast %cst_20 : f32 to vector<16x128xf32>
    %29 = arith.maximumf %27, %28 : vector<16x128xf32>
    %30 = arith.addf %17, %29 : vector<16x128xf32>
    %c0_21 = arith.constant 0 : index
    %c0_22 = arith.constant 0 : index
    %31 = vector.load %arg4[%c0_21, %c0_22] : memref<16x128xf32, #tpu.memory_space<vmem>>, vector<16x128xf32>
    tpu.vector_store %arg4[%c0_21, %c0_22], %30 {strides = array<i32>} : memref<16x128xf32, #tpu.memory_space<vmem>>, vector<16x128xf32>,
    return
  }
  func.func @transform_0(%arg0: i32) -> (i32, i32) {
    %c0_i32 = arith.constant 0 : i32
    %c0_i32_0 = arith.constant 0 : i32
    return %arg0, %c0_i32 : i32, i32
  }
  func.func @transform_1(%arg0: i32) -> (i32, i32) {
    %c0_i32 = arith.constant 0 : i32
    %c0_i32_0 = arith.constant 0 : i32
    %c0_i32_1 = arith.constant 0 : i32
    return %c0_i32, %c0_i32_0 : i32, i32
  }
  func.func @transform_2(%arg0: i32) -> (i32, i32, i32) {
    %c0_i32 = arith.constant 0 : i32
    %c0_i32_0 = arith.constant 0 : i32
    %c0_i32_1 = arith.constant 0 : i32
    %c0_i32_2 = arith.constant 0 : i32
    return %c0_i32, %c0_i32_0, %c0_i32_1 : i32, i32, i32
  }
  func.func @transform_3(%arg0: i32) -> (i32, i32) {
    %c0_i32 = arith.constant 0 : i32
    %c0_i32_0 = arith.constant 0 : i32
    return %arg0, %c0_i32 : i32, i32
  }
}

</mosaic_0001>

<llo_original>
// kernel: tpu_custom_call.1
$region0: #{tpu_custom_call.1}
  #allocation0 [shape = 'u32[]', space=smem, size = 0x4, offset = 0x4, fixed_abs, tag = 'smem constant byte address 0x4 - core index']
  #allocation1 [shape = 'u32[144,128]{1,0:T(1,128)}', space=vmem, size = 0x12000, scoped, tag = 'internal scratch']
  %s0 = inlined_call_operand.hbm [shape: bf16[16,64], index: 0, kind: input, shape index: {}]
  %s1 = inlined_call_operand.hbm [shape: bf16[64,128], index: 1, kind: input, shape index: {}]
  %s2 = inlined_call_operand.hbm [shape: bf16[4,128,128], index: 2, kind: input, shape index: {}]
  %s3 = inlined_call_operand.hbm [shape: f32[16,128], index: 3, kind: output, shape index: {}]
  %s4 = sld [smem:[#allocation0]]
  $region34: #{tpu_custom_call.1} parent=0
    _
  %s6 = ssub.s32 1, %s4
  %s7 = scalar_select 0, %s6, %s4
  $region1: #{tpu_custom_call.1} parent=0
    #allocation2 [shape = 'u8[4096]{0}', space=vmem, size = 0x1000, scoped, tag = 'input window, operand 0, single buffered']
    #allocation3 [shape = 's32[1]{0}', space=sflag, size = 0x4, scoped, tag = 'scoped memory for tpu_custom_call.1']
    #allocation4 [shape = 's32[1]{0}', space=sflag, size = 0x4, scoped, tag = 'scoped memory for tpu_custom_call.1']
    #allocation5 [shape = 'u8[16384]{0}', space=vmem, size = 0x4000, scoped, tag = 'input window, operand 1, single buffered']
    #allocation6 [shape = 's32[1]{0}', space=sflag, size = 0x4, scoped, tag = 'scoped memory for tpu_custom_call.1']
    #allocation7 [shape = 'u8[131072]{0}', space=vmem, size = 0x20000, scoped, tag = 'input window, operand 2, single buffered']
    #allocation8 [shape = 'u8[8192]{0}', space=vmem, size = 0x2000, scoped, tag = 'output window, operand 0, single buffered']
    %8 = vsyncpa [#allocation3], 0
    %9 = vsyncpa [#allocation6], 0
    %10 = vsyncpa [#allocation4], 0
    // Predicated region
    $region2: #{tpu_custom_call.1} parent=1 // pred_check
      _
    $region3: #{tpu_custom_call.1} parent=1 // pred_check_branch
      %12 = sbr.rel (0) target = $region5
    $region4: #{tpu_custom_call.1} parent=1 // pred_region
      %s14 = ssub.s32 128, 128
      %15 = vsyncadd [#allocation3], %s14
      %s16 = sshll.u32 [#allocation2], 4
      %s17 = int_to_ptr.vmem [resolvable:$true] %s16
      %22 = dma.hbm_to_vmem [thread:$0]  %s0, 128, %s17, [#allocation3], 64, 64, 4
    $region5: #{tpu_custom_call.1} parent=1 // pred_fallthru
      _
    // Predicated region
    $region6: #{tpu_custom_call.1} parent=1 // pred_check
      _
    $region7: #{tpu_custom_call.1} parent=1 // pred_check_branch
      %24 = sbr.rel (0) target = $region9
    $region8: #{tpu_custom_call.1} parent=1 // pred_region
      %s26 = ssub.s32 512, 512
      %27 = vsyncadd [#allocation6], %s26
      %s28 = sshll.u32 [#allocation5], 4
      %s29 = int_to_ptr.vmem [resolvable:$true] %s28
      %34 = dma.hbm_to_vmem [thread:$0]  %s1, 512, %s29, [#allocation6], 64, 64, 4
    $region9: #{tpu_custom_call.1} parent=1 // pred_fallthru
      _
    // Predicated region
    $region10: #{tpu_custom_call.1} parent=1 // pred_check
      _
    $region11: #{tpu_custom_call.1} parent=1 // pred_check_branch
      %36 = sbr.rel (0) target = $region13
    $region12: #{tpu_custom_call.1} parent=1 // pred_region
      %s38 = ssub.s32 4096, 4096
      %39 = vsyncadd [#allocation6], %s38
      %s40 = sshll.u32 [#allocation7], 4
      %s41 = int_to_ptr.vmem [resolvable:$true] %s40
      %46 = dma.hbm_to_vmem [thread:$0]  %s2, 4096, %s41, [#allocation6], 64, 64, 4
    $region13: #{tpu_custom_call.1} parent=1 // pred_fallthru
      _
    // Predicated region
    $region14: #{tpu_custom_call.1} parent=1 // pred_check
      _
    $region15: #{tpu_custom_call.1} parent=1 // pred_check_branch
      %48 = sbr.rel (0) target = $region17
    $region16: #{tpu_custom_call.1} parent=1 // pred_region
      %49 = dma.done [#allocation3], 128
    $region17: #{tpu_custom_call.1} parent=1 // pred_fallthru
      _
    // Predicated region
    $region18: #{tpu_custom_call.1} parent=1 // pred_check
      _
    $region19: #{tpu_custom_call.1} parent=1 // pred_check_branch
      %51 = sbr.rel (0) target = $region21
    $region20: #{tpu_custom_call.1} parent=1 // pred_region
      %52 = dma.done [#allocation6], 512
    $region21: #{tpu_custom_call.1} parent=1 // pred_fallthru
      _
    // Predicated region
    $region22: #{tpu_custom_call.1} parent=1 // pred_check
      _
    $region23: #{tpu_custom_call.1} parent=1 // pred_check_branch
      %54 = sbr.rel (0) target = $region25
    $region24: #{tpu_custom_call.1} parent=1 // pred_region
      %55 = dma.done [#allocation6], 4096
    $region25: #{tpu_custom_call.1} parent=1 // pred_fallthru
      _
    %v57 = vld [vmem:[#allocation2] sm:$0xf]
    %v58 = vld [vmem:[#allocation2 + $0x4] sm:$0xf]
    %v59 = vld [vmem:[#allocation5] sm:$0xf]
    %v60 = vld [vmem:[#allocation5 + $0x4] sm:$0xf]
    %v61 = vld [vmem:[#allocation5 + $0x8] sm:$0xf]
    %v62 = vld [vmem:[#allocation5 + $0xc] sm:$0xf]
    %v63 = vld [vmem:[#allocation5 + $0x10] sm:$0xf]
    %v64 = vld [vmem:[#allocation5 + $0x14] sm:$0xf]
    %v65 = vld [vmem:[#allocation5 + $0x18] sm:$0xf]
    %v66 = vld [vmem:[#allocation5 + $0x1c] sm:$0xf]
    %v69 = vunpack.c.l.b16 %v57
    %v70 = vunpack.c.l.b16 %v58
    %v71 = vpack.c.b16 %v70, %v69
    %v80 = vunpack.c.l.b16 %v59
    %v81 = vunpack.c.l.b16 %v60
    %v82 = vunpack.c.l.b16 %v61
    %v83 = vunpack.c.l.b16 %v62
    %v84 = vunpack.c.l.b16 %v63
    %v85 = vunpack.c.l.b16 %v64
    %v86 = vunpack.c.l.b16 %v65
    %v87 = vunpack.c.l.b16 %v66
    %v88 = vpack.c.b16 %v81, %v80
    %v89 = vpack.c.b16 %v83, %v82
    %v90 = vpack.c.b16 %v85, %v84
    %v91 = vpack.c.b16 %v87, %v86
    %vm96 = vcmask 523264
    %v98 = vsel %vm96, %v71, 0
    %100 = vmatprep.subr.bf16.mxu0 0
    %101 = vmatpush1.bf16.msra.mxu0 0
    %102 = vmatprep.subr.bf16.mxu0 0
    %103 = vmatpush1.bf16.msra.mxu0 0
    %104 = vmatprep.subr.bf16.mxu0 0
    %105 = vmatpush1.bf16.msra.mxu0 0
    %106 = vmatprep.subr.bf16.mxu0 0
    %107 = vmatpush1.bf16.msra.mxu0 0
    %108 = vmatprep.subr.bf16.mxu0 0
    %109 = vmatpush1.bf16.msra.mxu0 %v91
    %110 = vmatprep.subr.bf16.mxu0 0
    %111 = vmatpush1.bf16.msra.mxu0 %v90
    %112 = vmatprep.subr.bf16.mxu0 0
    %113 = vmatpush1.bf16.msra.mxu0 %v89
    %114 = vmatprep.subr.bf16.mxu0 0
    %115 = vmatpush1.bf16.msra.mxu0 %v88
    %116 = vmatprep.subr.bf16.mxu0 0
    %117 = vmatpush2.bf16.msra.mxu0 0
    %118 = vmatprep.subr.bf16.mxu0 0
    %119 = vmatpush2.bf16.msra.mxu0 0
    %120 = vmatprep.subr.bf16.mxu0 0
    %121 = vmatpush2.bf16.msra.mxu0 0
    %122 = vmatprep.subr.bf16.mxu0 0
    %123 = vmatpush2.bf16.msra.mxu0 0
    %124 = vmatprep.subr.bf16.mxu0 0
    %125 = vmatpush2.bf16.msra.mxu0 0
    %126 = vmatprep.subr.bf16.mxu0 0
    %127 = vmatpush2.bf16.msra.mxu0 0
    %128 = vmatprep.subr.bf16.mxu0 0
    %129 = vmatpush2.bf16.msra.mxu0 0
    %130 = vmatprep.subr.bf16.mxu0 0
    %131 = vmatpush2.bf16.msra.mxu0 0
    %132 = vmatprep.mubr.bf16.mxu0 0
    %133 = vmatmul.mubr.bf16.gmra.mxu0 %v98
    %v134 = vpop.f32.mrf.mxu0
    %v135 = vadd.f32 0.0, %v134
    %v136 = vpop.f32.mrf.mxu0
    %v137 = vpop.f32.mrf.mxu0
    %v138 = vadd.f32 0.0, %v137
    %v139 = vpop.f32.mrf.mxu0
    %140 = vdwg.mxu0
    %v141 = vmax.f32 %v135, 0.0
    %v142 = vmax.f32 %v138, 0.0
    %v143 = vld [vmem:[#allocation7] sm:$0xf]
    %v144 = vld [vmem:[#allocation7 + $0x4] sm:$0xf]
    %v145 = vld [vmem:[#allocation7 + $0x8] sm:$0xf]
    %v146 = vld [vmem:[#allocation7 + $0xc] sm:$0xf]
    %v147 = vld [vmem:[#allocation7 + $0x10] sm:$0xf]
    %v148 = vld [vmem:[#allocation7 + $0x14] sm:$0xf]
    %v149 = vld [vmem:[#allocation7 + $0x18] sm:$0xf]
    %v150 = vld [vmem:[#allocation7 + $0x1c] sm:$0xf]
    %v151 = vld [vmem:[#allocation7 + $0x20] sm:$0xf]
    %v152 = vld [vmem:[#allocation7 + $0x24] sm:$0xf]
    %v153 = vld [vmem:[#allocation7 + $0x28] sm:$0xf]
    %v154 = vld [vmem:[#allocation7 + $0x2c] sm:$0xf]
    %v155 = vld [vmem:[#allocation7 + $0x30] sm:$0xf]
    %v156 = vld [vmem:[#allocation7 + $0x34] sm:$0xf]
    %v157 = vld [vmem:[#allocation7 + $0x38] sm:$0xf]
    %v158 = vld [vmem:[#allocation7 + $0x3c] sm:$0xf]
    %s159 = scalar_lea.vmem [#allocation7], 64
    %v160 = vld [vmem:[%s159] sm:$0xf]
    %v161 = vld [vmem:[%s159 + $0x4] sm:$0xf]
    %v162 = vld [vmem:[%s159 + $0x8] sm:$0xf]
    %v163 = vld [vmem:[%s159 + $0xc] sm:$0xf]
    %v164 = vld [vmem:[%s159 + $0x10] sm:$0xf]
    %v165 = vld [vmem:[%s159 + $0x14] sm:$0xf]
    %v166 = vld [vmem:[%s159 + $0x18] sm:$0xf]
    %v167 = vld [vmem:[%s159 + $0x1c] sm:$0xf]
    %v168 = vld [vmem:[%s159 + $0x20] sm:$0xf]
    %v169 = vld [vmem:[%s159 + $0x24] sm:$0xf]
    %v170 = vld [vmem:[%s159 + $0x28] sm:$0xf]
    %v171 = vld [vmem:[%s159 + $0x2c] sm:$0xf]
    %v172 = vld [vmem:[%s159 + $0x30] sm:$0xf]
    %v173 = vld [vmem:[%s159 + $0x34] sm:$0xf]
    %v174 = vld [vmem:[%s159 + $0x38] sm:$0xf]
    %v175 = vld [vmem:[%s159 + $0x3c] sm:$0xf]
    %v176 = vpack.c.bf16 %v142, %v141
    %v193 = vunpack.c.l.b16 %v143
    %v194 = vunpack.c.l.b16 %v144
    %v195 = vunpack.c.l.b16 %v145
    %v196 = vunpack.c.l.b16 %v146
    %v197 = vunpack.c.l.b16 %v147
    %v198 = vunpack.c.l.b16 %v148
    %v199 = vunpack.c.l.b16 %v149
    %v200 = vunpack.c.l.b16 %v150
    %v201 = vunpack.c.l.b16 %v151
    %v202 = vunpack.c.l.b16 %v152
    %v203 = vunpack.c.l.b16 %v153
    %v204 = vunpack.c.l.b16 %v154
    %v205 = vunpack.c.l.b16 %v155
    %v206 = vunpack.c.l.b16 %v156
    %v207 = vunpack.c.l.b16 %v157
    %v208 = vunpack.c.l.b16 %v158
    %v209 = vpack.c.b16 %v194, %v193
    %v210 = vpack.c.b16 %v196, %v195
    %v211 = vpack.c.b16 %v198, %v197
    %v212 = vpack.c.b16 %v200, %v199
    %v213 = vpack.c.b16 %v202, %v201
    %v214 = vpack.c.b16 %v204, %v203
    %v215 = vpack.c.b16 %v206, %v205
    %v216 = vpack.c.b16 %v208, %v207
    %225 = vmatprep.subr.bf16.mxu0 0
    %226 = vmatpush1.bf16.msra.mxu0 %v216
    %227 = vmatprep.subr.bf16.mxu0 0
    %228 = vmatpush1.bf16.msra.mxu0 %v215
    %229 = vmatprep.subr.bf16.mxu0 0
    %230 = vmatpush1.bf16.msra.mxu0 %v214
    %231 = vmatprep.subr.bf16.mxu0 0
    %232 = vmatpush1.bf16.msra.mxu0 %v213
    %233 = vmatprep.subr.bf16.mxu0 0
    %234 = vmatpush1.bf16.msra.mxu0 %v212
    %235 = vmatprep.subr.bf16.mxu0 0
    %236 = vmatpush1.bf16.msra.mxu0 %v211
    %237 = vmatprep.subr.bf16.mxu0 0
    %238 = vmatpush1.bf16.msra.mxu0 %v210
    %239 = vmatprep.subr.bf16.mxu0 0
    %240 = vmatpush1.bf16.msra.mxu0 %v209
    %241 = vmatprep.subr.bf16.mxu0 0
    %242 = vmatpush2.bf16.msra.mxu0 0
    %243 = vmatprep.subr.bf16.mxu0 0
    %244 = vmatpush2.bf16.msra.mxu0 0
    %245 = vmatprep.subr.bf16.mxu0 0
    %246 = vmatpush2.bf16.msra.mxu0 0
    %247 = vmatprep.subr.bf16.mxu0 0
    %248 = vmatpush2.bf16.msra.mxu0 0
    %249 = vmatprep.subr.bf16.mxu0 0
    %250 = vmatpush2.bf16.msra.mxu0 0
    %251 = vmatprep.subr.bf16.mxu0 0
    %252 = vmatpush2.bf16.msra.mxu0 0
    %253 = vmatprep.subr.bf16.mxu0 0
    %254 = vmatpush2.bf16.msra.mxu0 0
    %255 = vmatprep.subr.bf16.mxu0 0
    %256 = vmatpush2.bf16.msra.mxu0 0
    %257 = vmatprep.mubr.bf16.mxu0 0
    %258 = vmatmul.mubr.bf16.gmra.mxu0 %v176
    %v259 = vpop.f32.mrf.mxu0
    %v260 = vadd.f32 0.0, %v259
    %v261 = vpop.f32.mrf.mxu0
    %v262 = vpop.f32.mrf.mxu0
    %v263 = vadd.f32 0.0, %v262
    %v264 = vpop.f32.mrf.mxu0
    %265 = vdwg.mxu0
    %v266 = vmax.f32 %v260, 0.0
    %v267 = vmax.f32 %v263, 0.0
    %v268 = vpack.c.bf16 %v267, %v266
    %v285 = vunpack.c.l.b16 %v160
    %v286 = vunpack.c.l.b16 %v161
    %v287 = vunpack.c.l.b16 %v162
    %v288 = vunpack.c.l.b16 %v163
    %v289 = vunpack.c.l.b16 %v164
    %v290 = vunpack.c.l.b16 %v165
    %v291 = vunpack.c.l.b16 %v166
    %v292 = vunpack.c.l.b16 %v167
    %v293 = vunpack.c.l.b16 %v168
    %v294 = vunpack.c.l.b16 %v169
    %v295 = vunpack.c.l.b16 %v170
    %v296 = vunpack.c.l.b16 %v171
    %v297 = vunpack.c.l.b16 %v172
    %v298 = vunpack.c.l.b16 %v173
    %v299 = vunpack.c.l.b16 %v174
    %v300 = vunpack.c.l.b16 %v175
    %v301 = vpack.c.b16 %v286, %v285
    %v302 = vpack.c.b16 %v288, %v287
    %v303 = vpack.c.b16 %v290, %v289
    %v304 = vpack.c.b16 %v292, %v291
    %v305 = vpack.c.b16 %v294, %v293
    %v306 = vpack.c.b16 %v296, %v295
    %v307 = vpack.c.b16 %v298, %v297
    %v308 = vpack.c.b16 %v300, %v299
    %317 = vmatprep.subr.bf16.mxu0 0
    %318 = vmatpush1.bf16.msra.mxu0 %v308
    %319 = vmatprep.subr.bf16.mxu0 0
    %320 = vmatpush1.bf16.msra.mxu0 %v307
    %321 = vmatprep.subr.bf16.mxu0 0
    %322 = vmatpush1.bf16.msra.mxu0 %v306
    %323 = vmatprep.subr.bf16.mxu0 0
    %324 = vmatpush1.bf16.msra.mxu0 %v305
    %325 = vmatprep.subr.bf16.mxu0 0
    %326 = vmatpush1.bf16.msra.mxu0 %v304
    %327 = vmatprep.subr.bf16.mxu0 0
    %328 = vmatpush1.bf16.msra.mxu0 %v303
    %329 = vmatprep.subr.bf16.mxu0 0
    %330 = vmatpush1.bf16.msra.mxu0 %v302
    %331 = vmatprep.subr.bf16.mxu0 0
    %332 = vmatpush1.bf16.msra.mxu0 %v301
    %333 = vmatprep.subr.bf16.mxu0 0
    %334 = vmatpush2.bf16.msra.mxu0 0
    %335 = vmatprep.subr.bf16.mxu0 0
    %336 = vmatpush2.bf16.msra.mxu0 0
    %337 = vmatprep.subr.bf16.mxu0 0
    %338 = vmatpush2.bf16.msra.mxu0 0
    %339 = vmatprep.subr.bf16.mxu0 0
    %340 = vmatpush2.bf16.msra.mxu0 0
    %341 = vmatprep.subr.bf16.mxu0 0
    %342 = vmatpush2.bf16.msra.mxu0 0
    %343 = vmatprep.subr.bf16.mxu0 0
    %344 = vmatpush2.bf16.msra.mxu0 0
    %345 = vmatprep.subr.bf16.mxu0 0
    %346 = vmatpush2.bf16.msra.mxu0 0
    %347 = vmatprep.subr.bf16.mxu0 0
    %348 = vmatpush2.bf16.msra.mxu0 0
    %349 = vmatprep.mubr.bf16.mxu0 0
    %350 = vmatmul.mubr.bf16.gmra.mxu0 %v268
    %v351 = vpop.f32.mrf.mxu0
    %v352 = vadd.f32 0.0, %v351
    %v353 = vpop.f32.mrf.mxu0
    %v354 = vpop.f32.mrf.mxu0
    %v355 = vadd.f32 0.0, %v354
    %v356 = vpop.f32.mrf.mxu0
    %357 = vdwg.mxu0
    %v358 = vmax.f32 %v352, 0.0
    %v359 = vmax.f32 %v355, 0.0
    %v360 = vadd.f32 %v141, %v358
    %v361 = vadd.f32 %v142, %v359
    %s362 = scalar_lea.vmem [#allocation7], 128
    %v363 = vld [vmem:[%s362] sm:$0xf]
    %v364 = vld [vmem:[%s362 + $0x4] sm:$0xf]
    %v365 = vld [vmem:[%s362 + $0x8] sm:$0xf]
    %v366 = vld [vmem:[%s362 + $0xc] sm:$0xf]
    %v367 = vld [vmem:[%s362 + $0x10] sm:$0xf]
    %v368 = vld [vmem:[%s362 + $0x14] sm:$0xf]
    %v369 = vld [vmem:[%s362 + $0x18] sm:$0xf]
    %v370 = vld [vmem:[%s362 + $0x1c] sm:$0xf]
    %v371 = vld [vmem:[%s362 + $0x20] sm:$0xf]
    %v372 = vld [vmem:[%s362 + $0x24] sm:$0xf]
    %v373 = vld [vmem:[%s362 + $0x28] sm:$0xf]
    %v374 = vld [vmem:[%s362 + $0x2c] sm:$0xf]
    %v375 = vld [vmem:[%s362 + $0x30] sm:$0xf]
    %v376 = vld [vmem:[%s362 + $0x34] sm:$0xf]
    %v377 = vld [vmem:[%s362 + $0x38] sm:$0xf]
    %v378 = vld [vmem:[%s362 + $0x3c] sm:$0xf]
    %s379 = scalar_lea.vmem [#allocation7], 192
    %v380 = vld [vmem:[%s379] sm:$0xf]
    %v381 = vld [vmem:[%s379 + $0x4] sm:$0xf]
    %v382 = vld [vmem:[%s379 + $0x8] sm:$0xf]
    %v383 = vld [vmem:[%s379 + $0xc] sm:$0xf]
    %v384 = vld [vmem:[%s379 + $0x10] sm:$0xf]
    %v385 = vld [vmem:[%s379 + $0x14] sm:$0xf]
    %v386 = vld [vmem:[%s379 + $0x18] sm:$0xf]
    %v387 = vld [vmem:[%s379 + $0x1c] sm:$0xf]
    %v388 = vld [vmem:[%s379 + $0x20] sm:$0xf]
    %v389 = vld [vmem:[%s379 + $0x24] sm:$0xf]
    %v390 = vld [vmem:[%s379 + $0x28] sm:$0xf]
    %v391 = vld [vmem:[%s379 + $0x2c] sm:$0xf]
    %v392 = vld [vmem:[%s379 + $0x30] sm:$0xf]
    %v393 = vld [vmem:[%s379 + $0x34] sm:$0xf]
    %v394 = vld [vmem:[%s379 + $0x38] sm:$0xf]
    %v395 = vld [vmem:[%s379 + $0x3c] sm:$0xf]
    %v396 = vpack.c.bf16 %v361, %v360
    %v413 = vunpack.c.l.b16 %v363
    %v414 = vunpack.c.l.b16 %v364
    %v415 = vunpack.c.l.b16 %v365
    %v416 = vunpack.c.l.b16 %v366
    %v417 = vunpack.c.l.b16 %v367
    %v418 = vunpack.c.l.b16 %v368
    %v419 = vunpack.c.l.b16 %v369
    %v420 = vunpack.c.l.b16 %v370
    %v421 = vunpack.c.l.b16 %v371
    %v422 = vunpack.c.l.b16 %v372
    %v423 = vunpack.c.l.b16 %v373
    %v424 = vunpack.c.l.b16 %v374
    %v425 = vunpack.c.l.b16 %v375
    %v426 = vunpack.c.l.b16 %v376
    %v427 = vunpack.c.l.b16 %v377
    %v428 = vunpack.c.l.b16 %v378
    %v429 = vpack.c.b16 %v414, %v413
    %v430 = vpack.c.b16 %v416, %v415
    %v431 = vpack.c.b16 %v418, %v417
    %v432 = vpack.c.b16 %v420, %v419
    %v433 = vpack.c.b16 %v422, %v421
    %v434 = vpack.c.b16 %v424, %v423
    %v435 = vpack.c.b16 %v426, %v425
    %v436 = vpack.c.b16 %v428, %v427
    %445 = vmatprep.subr.bf16.mxu0 0
    %446 = vmatpush1.bf16.msra.mxu0 %v436
    %447 = vmatprep.subr.bf16.mxu0 0
    %448 = vmatpush1.bf16.msra.mxu0 %v435
    %449 = vmatprep.subr.bf16.mxu0 0
    %450 = vmatpush1.bf16.msra.mxu0 %v434
    %451 = vmatprep.subr.bf16.mxu0 0
    %452 = vmatpush1.bf16.msra.mxu0 %v433
    %453 = vmatprep.subr.bf16.mxu0 0
    %454 = vmatpush1.bf16.msra.mxu0 %v432
    %455 = vmatprep.subr.bf16.mxu0 0
    %456 = vmatpush1.bf16.msra.mxu0 %v431
    %457 = vmatprep.subr.bf16.mxu0 0
    %458 = vmatpush1.bf16.msra.mxu0 %v430
    %459 = vmatprep.subr.bf16.mxu0 0
    %460 = vmatpush1.bf16.msra.mxu0 %v429
    %461 = vmatprep.subr.bf16.mxu0 0
    %462 = vmatpush2.bf16.msra.mxu0 0
    %463 = vmatprep.subr.bf16.mxu0 0
    %464 = vmatpush2.bf16.msra.mxu0 0
    %465 = vmatprep.subr.bf16.mxu0 0
    %466 = vmatpush2.bf16.msra.mxu0 0
    %467 = vmatprep.subr.bf16.mxu0 0
    %468 = vmatpush2.bf16.msra.mxu0 0
    %469 = vmatprep.subr.bf16.mxu0 0
    %470 = vmatpush2.bf16.msra.mxu0 0
    %471 = vmatprep.subr.bf16.mxu0 0
    %472 = vmatpush2.bf16.msra.mxu0 0
    %473 = vmatprep.subr.bf16.mxu0 0
    %474 = vmatpush2.bf16.msra.mxu0 0
    %475 = vmatprep.subr.bf16.mxu0 0
    %476 = vmatpush2.bf16.msra.mxu0 0
    %477 = vmatprep.mubr.bf16.mxu0 0
    %478 = vmatmul.mubr.bf16.gmra.mxu0 %v396
    %v479 = vpop.f32.mrf.mxu0
    %v480 = vadd.f32 0.0, %v479
    %v481 = vpop.f32.mrf.mxu0
    %v482 = vpop.f32.mrf.mxu0
    %v483 = vadd.f32 0.0, %v482
    %v484 = vpop.f32.mrf.mxu0
    %485 = vdwg.mxu0
    %v486 = vmax.f32 %v480, 0.0
    %v487 = vmax.f32 %v483, 0.0
    %v488 = vpack.c.bf16 %v487, %v486
    %v505 = vunpack.c.l.b16 %v380
    %v506 = vunpack.c.l.b16 %v381
    %v507 = vunpack.c.l.b16 %v382
    %v508 = vunpack.c.l.b16 %v383
    %v509 = vunpack.c.l.b16 %v384
    %v510 = vunpack.c.l.b16 %v385
    %v511 = vunpack.c.l.b16 %v386
    %v512 = vunpack.c.l.b16 %v387
    %v513 = vunpack.c.l.b16 %v388
    %v514 = vunpack.c.l.b16 %v389
    %v515 = vunpack.c.l.b16 %v390
    %v516 = vunpack.c.l.b16 %v391
    %v517 = vunpack.c.l.b16 %v392
    %v518 = vunpack.c.l.b16 %v393
    %v519 = vunpack.c.l.b16 %v394
    %v520 = vunpack.c.l.b16 %v395
    %v521 = vpack.c.b16 %v506, %v505
    %v522 = vpack.c.b16 %v508, %v507
    %v523 = vpack.c.b16 %v510, %v509
    %v524 = vpack.c.b16 %v512, %v511
    %v525 = vpack.c.b16 %v514, %v513
    %v526 = vpack.c.b16 %v516, %v515
    %v527 = vpack.c.b16 %v518, %v517
    %v528 = vpack.c.b16 %v520, %v519
    %537 = vmatprep.subr.bf16.mxu0 0
    %538 = vmatpush1.bf16.msra.mxu0 %v528
    %539 = vmatprep.subr.bf16.mxu0 0
    %540 = vmatpush1.bf16.msra.mxu0 %v527
    %541 = vmatprep.subr.bf16.mxu0 0
    %542 = vmatpush1.bf16.msra.mxu0 %v526
    %543 = vmatprep.subr.bf16.mxu0 0
    %544 = vmatpush1.bf16.msra.mxu0 %v525
    %545 = vmatprep.subr.bf16.mxu0 0
    %546 = vmatpush1.bf16.msra.mxu0 %v524
    %547 = vmatprep.subr.bf16.mxu0 0
    %548 = vmatpush1.bf16.msra.mxu0 %v523
    %549 = vmatprep.subr.bf16.mxu0 0
    %550 = vmatpush1.bf16.msra.mxu0 %v522
    %551 = vmatprep.subr.bf16.mxu0 0
    %552 = vmatpush1.bf16.msra.mxu0 %v521
    %553 = vmatprep.subr.bf16.mxu0 0
    %554 = vmatpush2.bf16.msra.mxu0 0
    %555 = vmatprep.subr.bf16.mxu0 0
    %556 = vmatpush2.bf16.msra.mxu0 0
    %557 = vmatprep.subr.bf16.mxu0 0
    %558 = vmatpush2.bf16.msra.mxu0 0
    %559 = vmatprep.subr.bf16.mxu0 0
    %560 = vmatpush2.bf16.msra.mxu0 0
    %561 = vmatprep.subr.bf16.mxu0 0
    %562 = vmatpush2.bf16.msra.mxu0 0
    %563 = vmatprep.subr.bf16.mxu0 0
    %564 = vmatpush2.bf16.msra.mxu0 0
    %565 = vmatprep.subr.bf16.mxu0 0
    %566 = vmatpush2.bf16.msra.mxu0 0
    %567 = vmatprep.subr.bf16.mxu0 0
    %568 = vmatpush2.bf16.msra.mxu0 0
    %569 = vmatprep.mubr.bf16.mxu0 0
    %570 = vmatmul.mubr.bf16.gmra.mxu0 %v488
    %v571 = vpop.f32.mrf.mxu0
    %v572 = vadd.f32 0.0, %v571
    %v573 = vpop.f32.mrf.mxu0
    %v574 = vpop.f32.mrf.mxu0
    %v575 = vadd.f32 0.0, %v574
    %v576 = vpop.f32.mrf.mxu0
    %577 = vdwg.mxu0
    %v578 = vmax.f32 %v572, 0.0
    %v579 = vmax.f32 %v575, 0.0
    %v580 = vadd.f32 %v360, %v578
    %v581 = vadd.f32 %v361, %v579
    %582 = vst [vmem:[#allocation8] sm:$0xff] %v580
    %583 = vst [vmem:[#allocation8 + $0x8] sm:$0xff] %v581
    // Predicated region
    $region26: #{tpu_custom_call.1} parent=1 // pred_check
      _
    $region27: #{tpu_custom_call.1} parent=1 // pred_check_branch
      %585 = sbr.rel (0) target = $region29
    $region28: #{tpu_custom_call.1} parent=1 // pred_region
      %s587 = ssub.s32 256, 256
      %588 = vsyncadd [#allocation4], %s587
      %s589 = sshll.u32 [#allocation8], 4
      %s590 = int_to_ptr.vmem [resolvable:$true] %s589
      %595 = dma.vmem_to_hbm [thread:$0]  %s590, 256, %s3, [#allocation4], 128, 128, 8
    $region29: #{tpu_custom_call.1} parent=1 // pred_fallthru
      _
    // Predicated region
    $region30: #{tpu_custom_call.1} parent=1 // pred_check
      _
    $region31: #{tpu_custom_call.1} parent=1 // pred_check_branch
      %597 = sbr.rel (0) target = $region33
    $region32: #{tpu_custom_call.1} parent=1 // pred_region
      %598 = dma.done [#allocation4], 256
    $region33: #{tpu_custom_call.1} parent=1 // pred_fallthru
      _
    %599 = vsyncpa [#allocation3], 1
    %600 = vsyncpa [#allocation6], 1
    %601 = vsyncpa [#allocation4], 1

// kernel: tpu_custom_call.1
$region0: #{tpu_custom_call.1}
  #allocation0 [shape = 'u32[]', space=smem, size = 0x4, offset = 0x4, fixed_abs, tag = 'smem constant byte address 0x4 - core index']
  #allocation1 [shape = 'u32[144,128]{1,0:T(1,128)}', space=vmem, size = 0x12000, scoped, tag = 'internal scratch']
  %s0 = inlined_call_operand.hbm [shape: bf16[16,64], index: 0, kind: input, shape index: {}]
  %s1 = inlined_call_operand.hbm [shape: bf16[64,128], index: 1, kind: input, shape index: {}]
  %s2 = inlined_call_operand.hbm [shape: bf16[4,128,128], index: 2, kind: input, shape index: {}]
  %s3 = inlined_call_operand.hbm [shape: f32[16,128], index: 3, kind: output, shape index: {}]
  %s4 = sld [smem:[#allocation0]]
  $region34: #{tpu_custom_call.1} parent=0
    _
  %s6 = ssub.s32 1, %s4
  %s7 = scalar_select 0, %s6, %s4
  $region1: #{tpu_custom_call.1} parent=0
    #allocation2 [shape = 'u8[4096]{0}', space=vmem, size = 0x1000, scoped, tag = 'input window, operand 0, single buffered']
    #allocation3 [shape = 's32[1]{0}', space=sflag, size = 0x4, scoped, tag = 'scoped memory for tpu_custom_call.1']
    #allocation4 [shape = 's32[1]{0}', space=sflag, size = 0x4, scoped, tag = 'scoped memory for tpu_custom_call.1']
    #allocation5 [shape = 'u8[16384]{0}', space=vmem, size = 0x4000, scoped, tag = 'input window, operand 1, single buffered']
    #allocation6 [shape = 's32[1]{0}', space=sflag, size = 0x4, scoped, tag = 'scoped memory for tpu_custom_call.1']
    #allocation7 [shape = 'u8[131072]{0}', space=vmem, size = 0x20000, scoped, tag = 'input window, operand 2, single buffered']
    #allocation8 [shape = 'u8[8192]{0}', space=vmem, size = 0x2000, scoped, tag = 'output window, operand 0, single buffered']
    %8 = vsyncpa [#allocation3], 0
    %9 = vsyncpa [#allocation6], 0
    %10 = vsyncpa [#allocation4], 0
    // Predicated region
    $region2: #{tpu_custom_call.1} parent=1 // pred_check
      _
    $region3: #{tpu_custom_call.1} parent=1 // pred_check_branch
      %12 = sbr.rel (0) target = $region5
    $region4: #{tpu_custom_call.1} parent=1 // pred_region
      %s14 = ssub.s32 128, 128
      %15 = vsyncadd [#allocation3], %s14
      %s16 = sshll.u32 [#allocation2], 4
      %s17 = int_to_ptr.vmem [resolvable:$true] %s16
      %22 = dma.hbm_to_vmem [thread:$0]  %s0, 128, %s17, [#allocation3], 64, 64, 4
    $region5: #{tpu_custom_call.1} parent=1 // pred_fallthru
      _
    // Predicated region
    $region6: #{tpu_custom_call.1} parent=1 // pred_check
      _
    $region7: #{tpu_custom_call.1} parent=1 // pred_check_branch
      %24 = sbr.rel (0) target = $region9
    $region8: #{tpu_custom_call.1} parent=1 // pred_region
      %s26 = ssub.s32 512, 512
      %27 = vsyncadd [#allocation6], %s26
      %s28 = sshll.u32 [#allocation5], 4
      %s29 = int_to_ptr.vmem [resolvable:$true] %s28
      %34 = dma.hbm_to_vmem [thread:$0]  %s1, 512, %s29, [#allocation6], 64, 64, 4
    $region9: #{tpu_custom_call.1} parent=1 // pred_fallthru
      _
    // Predicated region
    $region10: #{tpu_custom_call.1} parent=1 // pred_check
      _
    $region11: #{tpu_custom_call.1} parent=1 // pred_check_branch
      %36 = sbr.rel (0) target = $region13
    $region12: #{tpu_custom_call.1} parent=1 // pred_region
      %s38 = ssub.s32 4096, 4096
      %39 = vsyncadd [#allocation6], %s38
      %s40 = sshll.u32 [#allocation7], 4
      %s41 = int_to_ptr.vmem [resolvable:$true] %s40
      %46 = dma.hbm_to_vmem [thread:$0]  %s2, 4096, %s41, [#allocation6], 64, 64, 4
    $region13: #{tpu_custom_call.1} parent=1 // pred_fallthru
      _
    // Predicated region
    $region14: #{tpu_custom_call.1} parent=1 // pred_check
      _
    $region15: #{tpu_custom_call.1} parent=1 // pred_check_branch
      %48 = sbr.rel (0) target = $region17
    $region16: #{tpu_custom_call.1} parent=1 // pred_region
      %49 = dma.done [#allocation3], 128
    $region17: #{tpu_custom_call.1} parent=1 // pred_fallthru
      _
    // Predicated region
    $region18: #{tpu_custom_call.1} parent=1 // pred_check
      _
    $region19: #{tpu_custom_call.1} parent=1 // pred_check_branch
      %51 = sbr.rel (0) target = $region21
    $region20: #{tpu_custom_call.1} parent=1 // pred_region
      %52 = dma.done [#allocation6], 512
    $region21: #{tpu_custom_call.1} parent=1 // pred_fallthru
      _
    // Predicated region
    $region22: #{tpu_custom_call.1} parent=1 // pred_check
      _
    $region23: #{tpu_custom_call.1} parent=1 // pred_check_branch
      %54 = sbr.rel (0) target = $region25
    $region24: #{tpu_custom_call.1} parent=1 // pred_region
      %55 = dma.done [#allocation6], 4096
    $region25: #{tpu_custom_call.1} parent=1 // pred_fallthru
      _
    %v57 = vld [vmem:[#allocation2] sm:$0xf]
    %v58 = vld [vmem:[#allocation2 + $0x4] sm:$0xf]
    %v59 = vld [vmem:[#allocation5] sm:$0xf]
    %v60 = vld [vmem:[#allocation5 + $0x4] sm:$0xf]
    %v61 = vld [vmem:[#allocation5 + $0x8] sm:$0xf]
    %v62 = vld [vmem:[#allocation5 + $0xc] sm:$0xf]
    %v63 = vld [vmem:[#allocation5 + $0x10] sm:$0xf]
    %v64 = vld [vmem:[#allocation5 + $0x14] sm:$0xf]
    %v65 = vld [vmem:[#allocation5 + $0x18] sm:$0xf]
    %v66 = vld [vmem:[#allocation5 + $0x1c] sm:$0xf]
    %v69 = vunpack.c.l.b16 %v57
    %v70 = vunpack.c.l.b16 %v58
    %v71 = vpack.c.b16 %v70, %v69
    %v80 = vunpack.c.l.b16 %v59
    %v81 = vunpack.c.l.b16 %v60
    %v82 = vunpack.c.l.b16 %v61
    %v83 = vunpack.c.l.b16 %v62
    %v84 = vunpack.c.l.b16 %v63
    %v85 = vunpack.c.l.b16 %v64
    %v86 = vunpack.c.l.b16 %v65
    %v87 = vunpack.c.l.b16 %v66
    %v88 = vpack.c.b16 %v81, %v80
    %v89 = vpack.c.b16 %v83, %v82
    %v90 = vpack.c.b16 %v85, %v84
    %v91 = vpack.c.b16 %v87, %v86
    %vm96 = vcmask 523264
    %v98 = vsel %vm96, %v71, 0
    %100 = vmatprep.subr.bf16.mxu0 0
    %101 = vmatpush1.bf16.msra.mxu0 0
    %102 = vmatprep.subr.bf16.mxu0 0
    %103 = vmatpush1.bf16.msra.mxu0 0
    %104 = vmatprep.subr.bf16.mxu0 0
    %105 = vmatpush1.bf16.msra.mxu0 0
    %106 = vmatprep.subr.bf16.mxu0 0
    %107 = vmatpush1.bf16.msra.mxu0 0
    %108 = vmatprep.subr.bf16.mxu0 0
    %109 = vmatpush1.bf16.msra.mxu0 %v91
    %110 = vmatprep.subr.bf16.mxu0 0
    %111 = vmatpush1.bf16.msra.mxu0 %v90
    %112 = vmatprep.subr.bf16.mxu0 0
    %113 = vmatpush1.bf16.msra.mxu0 %v89
    %114 = vmatprep.subr.bf16.mxu0 0
    %115 = vmatpush1.bf16.msra.mxu0 %v88
    %116 = vmatprep.subr.bf16.mxu0 0
    %117 = vmatpush2.bf16.msra.mxu0 0
    %118 = vmatprep.subr.bf16.mxu0 0
    %119 = vmatpush2.bf16.msra.mxu0 0
    %120 = vmatprep.subr.bf16.mxu0 0
    %121 = vmatpush2.bf16.msra.mxu0 0
    %122 = vmatprep.subr.bf16.mxu0 0
    %123 = vmatpush2.bf16.msra.mxu0 0
    %124 = vmatprep.subr.bf16.mxu0 0
    %125 = vmatpush2.bf16.msra.mxu0 0
    %126 = vmatprep.subr.bf16.mxu0 0
    %127 = vmatpush2.bf16.msra.mxu0 0
    %128 = vmatprep.subr.bf16.mxu0 0
    %129 = vmatpush2.bf16.msra.mxu0 0
    %130 = vmatprep.subr.bf16.mxu0 0
    %131 = vmatpush2.bf16.msra.mxu0 0
    %132 = vmatprep.mubr.bf16.mxu0 0
    %133 = vmatmul.mubr.bf16.gmra.mxu0 %v98
    %v134 = vpop.f32.mrf.mxu0
    %v135 = vadd.f32 0.0, %v134
    %v136 = vpop.f32.mrf.mxu0
    %v137 = vpop.f32.mrf.mxu0
    %v138 = vadd.f32 0.0, %v137
    %v139 = vpop.f32.mrf.mxu0
    %140 = vdwg.mxu0
    %v141 = vmax.f32 %v135, 0.0
    %v142 = vmax.f32 %v138, 0.0
    %v143 = vld [vmem:[#allocation7] sm:$0xf]
    %v144 = vld [vmem:[#allocation7 + $0x4] sm:$0xf]
    %v145 = vld [vmem:[#allocation7 + $0x8] sm:$0xf]
    %v146 = vld [vmem:[#allocation7 + $0xc] sm:$0xf]
    %v147 = vld [vmem:[#allocation7 + $0x10] sm:$0xf]
    %v148 = vld [vmem:[#allocation7 + $0x14] sm:$0xf]
    %v149 = vld [vmem:[#allocation7 + $0x18] sm:$0xf]
    %v150 = vld [vmem:[#allocation7 + $0x1c] sm:$0xf]
    %v151 = vld [vmem:[#allocation7 + $0x20] sm:$0xf]
    %v152 = vld [vmem:[#allocation7 + $0x24] sm:$0xf]
    %v153 = vld [vmem:[#allocation7 + $0x28] sm:$0xf]
    %v154 = vld [vmem:[#allocation7 + $0x2c] sm:$0xf]
    %v155 = vld [vmem:[#allocation7 + $0x30] sm:$0xf]
    %v156 = vld [vmem:[#allocation7 + $0x34] sm:$0xf]
    %v157 = vld [vmem:[#allocation7 + $0x38] sm:$0xf]
    %v158 = vld [vmem:[#allocation7 + $0x3c] sm:$0xf]
    %s159 = scalar_lea.vmem [#allocation7], 64
    %v160 = vld [vmem:[%s159] sm:$0xf]
    %v161 = vld [vmem:[%s159 + $0x4] sm:$0xf]
    %v162 = vld [vmem:[%s159 + $0x8] sm:$0xf]
    %v163 = vld [vmem:[%s159 + $0xc] sm:$0xf]
    %v164 = vld [vmem:[%s159 + $0x10] sm:$0xf]
    %v165 = vld [vmem:[%s159 + $0x14] sm:$0xf]
    %v166 = vld [vmem:[%s159 + $0x18] sm:$0xf]
    %v167 = vld [vmem:[%s159 + $0x1c] sm:$0xf]
    %v168 = vld [vmem:[%s159 + $0x20] sm:$0xf]
    %v169 = vld [vmem:[%s159 + $0x24] sm:$0xf]
    %v170 = vld [vmem:[%s159 + $0x28] sm:$0xf]
    %v171 = vld [vmem:[%s159 + $0x2c] sm:$0xf]
    %v172 = vld [vmem:[%s159 + $0x30] sm:$0xf]
    %v173 = vld [vmem:[%s159 + $0x34] sm:$0xf]
    %v174 = vld [vmem:[%s159 + $0x38] sm:$0xf]
    %v175 = vld [vmem:[%s159 + $0x3c] sm:$0xf]
    %v176 = vpack.c.bf16 %v142, %v141
    %v193 = vunpack.c.l.b16 %v143
    %v194 = vunpack.c.l.b16 %v144
    %v195 = vunpack.c.l.b16 %v145
    %v196 = vunpack.c.l.b16 %v146
    %v197 = vunpack.c.l.b16 %v147
    %v198 = vunpack.c.l.b16 %v148
    %v199 = vunpack.c.l.b16 %v149
    %v200 = vunpack.c.l.b16 %v150
    %v201 = vunpack.c.l.b16 %v151
    %v202 = vunpack.c.l.b16 %v152
    %v203 = vunpack.c.l.b16 %v153
    %v204 = vunpack.c.l.b16 %v154
    %v205 = vunpack.c.l.b16 %v155
    %v206 = vunpack.c.l.b16 %v156
    %v207 = vunpack.c.l.b16 %v157
    %v208 = vunpack.c.l.b16 %v158
    %v209 = vpack.c.b16 %v194, %v193
    %v210 = vpack.c.b16 %v196, %v195
    %v211 = vpack.c.b16 %v198, %v197
    %v212 = vpack.c.b16 %v200, %v199
    %v213 = vpack.c.b16 %v202, %v201
    %v214 = vpack.c.b16 %v204, %v203
    %v215 = vpack.c.b16 %v206, %v205
    %v216 = vpack.c.b16 %v208, %v207
    %225 = vmatprep.subr.bf16.mxu0 0
    %226 = vmatpush1.bf16.msra.mxu0 %v216
    %227 = vmatprep.subr.bf16.mxu0 0
    %228 = vmatpush1.bf16.msra.mxu0 %v215
    %229 = vmatprep.subr.bf16.mxu0 0
    %230 = vmatpush1.bf16.msra.mxu0 %v214
    %231 = vmatprep.subr.bf16.mxu0 0
    %232 = vmatpush1.bf16.msra.mxu0 %v213
    %233 = vmatprep.subr.bf16.mxu0 0
    %234 = vmatpush1.bf16.msra.mxu0 %v212
    %235 = vmatprep.subr.bf16.mxu0 0
    %236 = vmatpush1.bf16.msra.mxu0 %v211
    %237 = vmatprep.subr.bf16.mxu0 0
    %238 = vmatpush1.bf16.msra.mxu0 %v210
    %239 = vmatprep.subr.bf16.mxu0 0
    %240 = vmatpush1.bf16.msra.mxu0 %v209
    %241 = vmatprep.subr.bf16.mxu0 0
    %242 = vmatpush2.bf16.msra.mxu0 0
    %243 = vmatprep.subr.bf16.mxu0 0
    %244 = vmatpush2.bf16.msra.mxu0 0
    %245 = vmatprep.subr.bf16.mxu0 0
    %246 = vmatpush2.bf16.msra.mxu0 0
    %247 = vmatprep.subr.bf16.mxu0 0
    %248 = vmatpush2.bf16.msra.mxu0 0
    %249 = vmatprep.subr.bf16.mxu0 0
    %250 = vmatpush2.bf16.msra.mxu0 0
    %251 = vmatprep.subr.bf16.mxu0 0
    %252 = vmatpush2.bf16.msra.mxu0 0
    %253 = vmatprep.subr.bf16.mxu0 0
    %254 = vmatpush2.bf16.msra.mxu0 0
    %255 = vmatprep.subr.bf16.mxu0 0
    %256 = vmatpush2.bf16.msra.mxu0 0
    %257 = vmatprep.mubr.bf16.mxu0 0
    %258 = vmatmul.mubr.bf16.gmra.mxu0 %v176
    %v259 = vpop.f32.mrf.mxu0
    %v260 = vadd.f32 0.0, %v259
    %v261 = vpop.f32.mrf.mxu0
    %v262 = vpop.f32.mrf.mxu0
    %v263 = vadd.f32 0.0, %v262
    %v264 = vpop.f32.mrf.mxu0
    %265 = vdwg.mxu0
    %v266 = vmax.f32 %v260, 0.0
    %v267 = vmax.f32 %v263, 0.0
    %v268 = vpack.c.bf16 %v267, %v266
    %v285 = vunpack.c.l.b16 %v160
    %v286 = vunpack.c.l.b16 %v161
    %v287 = vunpack.c.l.b16 %v162
    %v288 = vunpack.c.l.b16 %v163
    %v289 = vunpack.c.l.b16 %v164
    %v290 = vunpack.c.l.b16 %v165
    %v291 = vunpack.c.l.b16 %v166
    %v292 = vunpack.c.l.b16 %v167
    %v293 = vunpack.c.l.b16 %v168
    %v294 = vunpack.c.l.b16 %v169
    %v295 = vunpack.c.l.b16 %v170
    %v296 = vunpack.c.l.b16 %v171
    %v297 = vunpack.c.l.b16 %v172
    %v298 = vunpack.c.l.b16 %v173
    %v299 = vunpack.c.l.b16 %v174
    %v300 = vunpack.c.l.b16 %v175
    %v301 = vpack.c.b16 %v286, %v285
    %v302 = vpack.c.b16 %v288, %v287
    %v303 = vpack.c.b16 %v290, %v289
    %v304 = vpack.c.b16 %v292, %v291
    %v305 = vpack.c.b16 %v294, %v293
    %v306 = vpack.c.b16 %v296, %v295
    %v307 = vpack.c.b16 %v298, %v297
    %v308 = vpack.c.b16 %v300, %v299
    %317 = vmatprep.subr.bf16.mxu0 0
    %318 = vmatpush1.bf16.msra.mxu0 %v308
    %319 = vmatprep.subr.bf16.mxu0 0
    %320 = vmatpush1.bf16.msra.mxu0 %v307
    %321 = vmatprep.subr.bf16.mxu0 0
    %322 = vmatpush1.bf16.msra.mxu0 %v306
    %323 = vmatprep.subr.bf16.mxu0 0
    %324 = vmatpush1.bf16.msra.mxu0 %v305
    %325 = vmatprep.subr.bf16.mxu0 0
    %326 = vmatpush1.bf16.msra.mxu0 %v304
    %327 = vmatprep.subr.bf16.mxu0 0
    %328 = vmatpush1.bf16.msra.mxu0 %v303
    %329 = vmatprep.subr.bf16.mxu0 0
    %330 = vmatpush1.bf16.msra.mxu0 %v302
    %331 = vmatprep.subr.bf16.mxu0 0
    %332 = vmatpush1.bf16.msra.mxu0 %v301
    %333 = vmatprep.subr.bf16.mxu0 0
    %334 = vmatpush2.bf16.msra.mxu0 0
    %335 = vmatprep.subr.bf16.mxu0 0
    %336 = vmatpush2.bf16.msra.mxu0 0
    %337 = vmatprep.subr.bf16.mxu0 0
    %338 = vmatpush2.bf16.msra.mxu0 0
    %339 = vmatprep.subr.bf16.mxu0 0
    %340 = vmatpush2.bf16.msra.mxu0 0
    %341 = vmatprep.subr.bf16.mxu0 0
    %342 = vmatpush2.bf16.msra.mxu0 0
    %343 = vmatprep.subr.bf16.mxu0 0
    %344 = vmatpush2.bf16.msra.mxu0 0
    %345 = vmatprep.subr.bf16.mxu0 0
    %346 = vmatpush2.bf16.msra.mxu0 0
    %347 = vmatprep.subr.bf16.mxu0 0
    %348 = vmatpush2.bf16.msra.mxu0 0
    %349 = vmatprep.mubr.bf16.mxu0 0
    %350 = vmatmul.mubr.bf16.gmra.mxu0 %v268
    %v351 = vpop.f32.mrf.mxu0
    %v352 = vadd.f32 0.0, %v351
    %v353 = vpop.f32.mrf.mxu0
    %v354 = vpop.f32.mrf.mxu0
    %v355 = vadd.f32 0.0, %v354
    %v356 = vpop.f32.mrf.mxu0
    %357 = vdwg.mxu0
    %v358 = vmax.f32 %v352, 0.0
    %v359 = vmax.f32 %v355, 0.0
    %v360 = vadd.f32 %v141, %v358
    %v361 = vadd.f32 %v142, %v359
    %s362 = scalar_lea.vmem [#allocation7], 128
    %v363 = vld [vmem:[%s362] sm:$0xf]
    %v364 = vld [vmem:[%s362 + $0x4] sm:$0xf]
    %v365 = vld [vmem:[%s362 + $0x8] sm:$0xf]
    %v366 = vld [vmem:[%s362 + $0xc] sm:$0xf]
    %v367 = vld [vmem:[%s362 + $0x10] sm:$0xf]
    %v368 = vld [vmem:[%s362 + $0x14] sm:$0xf]
    %v369 = vld [vmem:[%s362 + $0x18] sm:$0xf]
    %v370 = vld [vmem:[%s362 + $0x1c] sm:$0xf]
    %v371 = vld [vmem:[%s362 + $0x20] sm:$0xf]
    %v372 = vld [vmem:[%s362 + $0x24] sm:$0xf]
    %v373 = vld [vmem:[%s362 + $0x28] sm:$0xf]
    %v374 = vld [vmem:[%s362 + $0x2c] sm:$0xf]
    %v375 = vld [vmem:[%s362 + $0x30] sm:$0xf]
    %v376 = vld [vmem:[%s362 + $0x34] sm:$0xf]
    %v377 = vld [vmem:[%s362 + $0x38] sm:$0xf]
    %v378 = vld [vmem:[%s362 + $0x3c] sm:$0xf]
    %s379 = scalar_lea.vmem [#allocation7], 192
    %v380 = vld [vmem:[%s379] sm:$0xf]
    %v381 = vld [vmem:[%s379 + $0x4] sm:$0xf]
    %v382 = vld [vmem:[%s379 + $0x8] sm:$0xf]
    %v383 = vld [vmem:[%s379 + $0xc] sm:$0xf]
    %v384 = vld [vmem:[%s379 + $0x10] sm:$0xf]
    %v385 = vld [vmem:[%s379 + $0x14] sm:$0xf]
    %v386 = vld [vmem:[%s379 + $0x18] sm:$0xf]
    %v387 = vld [vmem:[%s379 + $0x1c] sm:$0xf]
    %v388 = vld [vmem:[%s379 + $0x20] sm:$0xf]
    %v389 = vld [vmem:[%s379 + $0x24] sm:$0xf]
    %v390 = vld [vmem:[%s379 + $0x28] sm:$0xf]
    %v391 = vld [vmem:[%s379 + $0x2c] sm:$0xf]
    %v392 = vld [vmem:[%s379 + $0x30] sm:$0xf]
    %v393 = vld [vmem:[%s379 + $0x34] sm:$0xf]
    %v394 = vld [vmem:[%s379 + $0x38] sm:$0xf]
    %v395 = vld [vmem:[%s379 + $0x3c] sm:$0xf]
    %v396 = vpack.c.bf16 %v361, %v360
    %v413 = vunpack.c.l.b16 %v363
    %v414 = vunpack.c.l.b16 %v364
    %v415 = vunpack.c.l.b16 %v365
    %v416 = vunpack.c.l.b16 %v366
    %v417 = vunpack.c.l.b16 %v367
    %v418 = vunpack.c.l.b16 %v368
    %v419 = vunpack.c.l.b16 %v369
    %v420 = vunpack.c.l.b16 %v370
    %v421 = vunpack.c.l.b16 %v371
    %v422 = vunpack.c.l.b16 %v372
    %v423 = vunpack.c.l.b16 %v373
    %v424 = vunpack.c.l.b16 %v374
    %v425 = vunpack.c.l.b16 %v375
    %v426 = vunpack.c.l.b16 %v376
    %v427 = vunpack.c.l.b16 %v377
    %v428 = vunpack.c.l.b16 %v378
    %v429 = vpack.c.b16 %v414, %v413
    %v430 = vpack.c.b16 %v416, %v415
    %v431 = vpack.c.b16 %v418, %v417
    %v432 = vpack.c.b16 %v420, %v419
    %v433 = vpack.c.b16 %v422, %v421
    %v434 = vpack.c.b16 %v424, %v423
    %v435 = vpack.c.b16 %v426, %v425
    %v436 = vpack.c.b16 %v428, %v427
    %445 = vmatprep.subr.bf16.mxu0 0
    %446 = vmatpush1.bf16.msra.mxu0 %v436
    %447 = vmatprep.subr.bf16.mxu0 0
    %448 = vmatpush1.bf16.msra.mxu0 %v435
    %449 = vmatprep.subr.bf16.mxu0 0
    %450 = vmatpush1.bf16.msra.mxu0 %v434
    %451 = vmatprep.subr.bf16.mxu0 0
    %452 = vmatpush1.bf16.msra.mxu0 %v433
    %453 = vmatprep.subr.bf16.mxu0 0
    %454 = vmatpush1.bf16.msra.mxu0 %v432
    %455 = vmatprep.subr.bf16.mxu0 0
    %456 = vmatpush1.bf16.msra.mxu0 %v431
    %457 = vmatprep.subr.bf16.mxu0 0
    %458 = vmatpush1.bf16.msra.mxu0 %v430
    %459 = vmatprep.subr.bf16.mxu0 0
    %460 = vmatpush1.bf16.msra.mxu0 %v429
    %461 = vmatprep.subr.bf16.mxu0 0
    %462 = vmatpush2.bf16.msra.mxu0 0
    %463 = vmatprep.subr.bf16.mxu0 0
    %464 = vmatpush2.bf16.msra.mxu0 0
    %465 = vmatprep.subr.bf16.mxu0 0
    %466 = vmatpush2.bf16.msra.mxu0 0
    %467 = vmatprep.subr.bf16.mxu0 0
    %468 = vmatpush2.bf16.msra.mxu0 0
    %469 = vmatprep.subr.bf16.mxu0 0
    %470 = vmatpush2.bf16.msra.mxu0 0
    %471 = vmatprep.subr.bf16.mxu0 0
    %472 = vmatpush2.bf16.msra.mxu0 0
    %473 = vmatprep.subr.bf16.mxu0 0
    %474 = vmatpush2.bf16.msra.mxu0 0
    %475 = vmatprep.subr.bf16.mxu0 0
    %476 = vmatpush2.bf16.msra.mxu0 0
    %477 = vmatprep.mubr.bf16.mxu0 0
    %478 = vmatmul.mubr.bf16.gmra.mxu0 %v396
    %v479 = vpop.f32.mrf.mxu0
    %v480 = vadd.f32 0.0, %v479
    %v481 = vpop.f32.mrf.mxu0
    %v482 = vpop.f32.mrf.mxu0
    %v483 = vadd.f32 0.0, %v482
    %v484 = vpop.f32.mrf.mxu0
    %485 = vdwg.mxu0
    %v486 = vmax.f32 %v480, 0.0
    %v487 = vmax.f32 %v483, 0.0
    %v488 = vpack.c.bf16 %v487, %v486
    %v505 = vunpack.c.l.b16 %v380
    %v506 = vunpack.c.l.b16 %v381
    %v507 = vunpack.c.l.b16 %v382
    %v508 = vunpack.c.l.b16 %v383
    %v509 = vunpack.c.l.b16 %v384
    %v510 = vunpack.c.l.b16 %v385
    %v511 = vunpack.c.l.b16 %v386
    %v512 = vunpack.c.l.b16 %v387
    %v513 = vunpack.c.l.b16 %v388
    %v514 = vunpack.c.l.b16 %v389
    %v515 = vunpack.c.l.b16 %v390
    %v516 = vunpack.c.l.b16 %v391
    %v517 = vunpack.c.l.b16 %v392
    %v518 = vunpack.c.l.b16 %v393
    %v519 = vunpack.c.l.b16 %v394
    %v520 = vunpack.c.l.b16 %v395
    %v521 = vpack.c.b16 %v506, %v505
    %v522 = vpack.c.b16 %v508, %v507
    %v523 = vpack.c.b16 %v510, %v509
    %v524 = vpack.c.b16 %v512, %v511
    %v525 = vpack.c.b16 %v514, %v513
    %v526 = vpack.c.b16 %v516, %v515
    %v527 = vpack.c.b16 %v518, %v517
    %v528 = vpack.c.b16 %v520, %v519
    %537 = vmatprep.subr.bf16.mxu0 0
    %538 = vmatpush1.bf16.msra.mxu0 %v528
    %539 = vmatprep.subr.bf16.mxu0 0
    %540 = vmatpush1.bf16.msra.mxu0 %v527
    %541 = vmatprep.subr.bf16.mxu0 0
    %542 = vmatpush1.bf16.msra.mxu0 %v526
    %543 = vmatprep.subr.bf16.mxu0 0
    %544 = vmatpush1.bf16.msra.mxu0 %v525
    %545 = vmatprep.subr.bf16.mxu0 0
    %546 = vmatpush1.bf16.msra.mxu0 %v524
    %547 = vmatprep.subr.bf16.mxu0 0
    %548 = vmatpush1.bf16.msra.mxu0 %v523
    %549 = vmatprep.subr.bf16.mxu0 0
    %550 = vmatpush1.bf16.msra.mxu0 %v522
    %551 = vmatprep.subr.bf16.mxu0 0
    %552 = vmatpush1.bf16.msra.mxu0 %v521
    %553 = vmatprep.subr.bf16.mxu0 0
    %554 = vmatpush2.bf16.msra.mxu0 0
    %555 = vmatprep.subr.bf16.mxu0 0
    %556 = vmatpush2.bf16.msra.mxu0 0
    %557 = vmatprep.subr.bf16.mxu0 0
    %558 = vmatpush2.bf16.msra.mxu0 0
    %559 = vmatprep.subr.bf16.mxu0 0
    %560 = vmatpush2.bf16.msra.mxu0 0
    %561 = vmatprep.subr.bf16.mxu0 0
    %562 = vmatpush2.bf16.msra.mxu0 0
    %563 = vmatprep.subr.bf16.mxu0 0
    %564 = vmatpush2.bf16.msra.mxu0 0
    %565 = vmatprep.subr.bf16.mxu0 0
    %566 = vmatpush2.bf16.msra.mxu0 0
    %567 = vmatprep.subr.bf16.mxu0 0
    %568 = vmatpush2.bf16.msra.mxu0 0
    %569 = vmatprep.mubr.bf16.mxu0 0
    %570 = vmatmul.mubr.bf16.gmra.mxu0 %v488
    %v571 = vpop.f32.mrf.mxu0
    %v572 = vadd.f32 0.0, %v571
    %v573 = vpop.f32.mrf.mxu0
    %v574 = vpop.f32.mrf.mxu0
    %v575 = vadd.f32 0.0, %v574
    %v576 = vpop.f32.mrf.mxu0
    %577 = vdwg.mxu0
    %v578 = vmax.f32 %v572, 0.0
    %v579 = vmax.f32 %v575, 0.0
    %v580 = vadd.f32 %v360, %v578
    %v581 = vadd.f32 %v361, %v579
    %582 = vst [vmem:[#allocation8] sm:$0xff] %v580
    %583 = vst [vmem:[#allocation8 + $0x8] sm:$0xff] %v581
    // Predicated region
    $region26: #{tpu_custom_call.1} parent=1 // pred_check
      _
    $region27: #{tpu_custom_call.1} parent=1 // pred_check_branch
      %585 = sbr.rel (0) target = $region29
    $region28: #{tpu_custom_call.1} parent=1 // pred_region
      %s587 = ssub.s32 256, 256
      %588 = vsyncadd [#allocation4], %s587
      %s589 = sshll.u32 [#allocation8], 4
      %s590 = int_to_ptr.vmem [resolvable:$true] %s589
      %595 = dma.vmem_to_hbm [thread:$0]  %s590, 256, %s3, [#allocation4], 128, 128, 8
    $region29: #{tpu_custom_call.1} parent=1 // pred_fallthru
      _
    // Predicated region
    $region30: #{tpu_custom_call.1} parent=1 // pred_check
      _
    $region31: #{tpu_custom_call.1} parent=1 // pred_check_branch
      %597 = sbr.rel (0) target = $region33
    $region32: #{tpu_custom_call.1} parent=1 // pred_region
      %598 = dma.done [#allocation4], 256
    $region33: #{tpu_custom_call.1} parent=1 // pred_fallthru
      _
    %599 = vsyncpa [#allocation3], 1
    %600 = vsyncpa [#allocation6], 1
    %601 = vsyncpa [#allocation4], 1

</llo_original>
